<compile_context>
chip_gen: v7x
topology: tpu7x:2x2x1
jax: 0.10.0
libtpu: 0.0.40
codegen_flags: <defaults>
</compile_context>

<pallas_src>
import numpy as np
import jax
import jax.numpy as jnp
from jax.experimental import pallas as pl
from jax.experimental.pallas import tpu as pltpu


# ----------------------------- Pallas kernels ------------------------------ #

def _bn_relu_upsample_kernel(x_ref, scale_ref, shift_ref, ah_ref, awt_ref, o_ref):
    """One (batch, channel-tile) step: y = relu(x*scale + shift); up = Ah @ y @ Aw^T.

    x_ref:     (1, Cb, H, W)   f32   NCHW input block
    scale_ref: (Cb, 1, 1)      f32   per-channel BN scale
    shift_ref: (Cb, 1, 1)      f32   per-channel BN shift
    ah_ref:    (H2, H)         f32   row interpolation matrix
    awt_ref:   (W, W2)         f32   column interpolation matrix (transposed)
    o_ref:     (1, Cb, H2, W2) bf16  upsampled activation block
    """
    cb, h, w = x_ref.shape[1], x_ref.shape[2], x_ref.shape[3]
    h2 = ah_ref.shape[0]
    w2 = awt_ref.shape[1]

    x = x_ref[0]                                                    # (Cb, H, W)
    # BN (training-mode batch stats) + ReLU, kept in f32 (v5e has no bf16 VPU path).
    y = jnp.maximum(x * scale_ref[...] + shift_ref[...], 0.0)

    # Width upsample: one big MXU matmul (Cb*H, W) @ (W, W2).
    t = jnp.dot(y.reshape(cb * h, w), awt_ref[...],
                preferred_element_type=jnp.float32)                 # (Cb*H, W2)
    t = t.reshape(cb, h, w2)

    # Height upsample: channel-batched matmul (Cb, H2, H) @ (Cb, H, W2).
    ah_b = jnp.broadcast_to(ah_ref[...], (cb, h2, h))
    u = jax.lax.dot_general(
        ah_b, t,
        dimension_numbers=(((2,), (1,)), ((0,), (0,))),
        preferred_element_type=jnp.float32)                         # (Cb, H2, W2)

    o_ref[0] = u.astype(o_ref.dtype)


def _ws_conv3x3_kernel(xp_ref, w_ref, o_ref):
    """3x3 conv (stride 1, pad 1, bias=False) as 9 accumulated shifted matmuls.

    xp_ref: (1, Hp, Wp, C)    bf16  zero-padded NHWC activation, one batch element
    w_ref:  (9, C, TCout)     bf16  weight-standardized taps, t = 3*ky + kx
    o_ref:  (1, H2*W2, TCout) f32   conv output rows, (h2, w2)-major
    """
    hp, wp, c = xp_ref.shape[1], xp_ref.shape[2], xp_ref.shape[3]
    h2, w2 = hp - 2, wp - 2
    tcout = w_ref.shape[2]

    acc = jnp.zeros((h2 * w2, tcout), jnp.float32)
    for ky in range(3):                       # static 9-tap unroll, f32 accumulation
        for kx in range(3):
            a = xp_ref[0, ky:ky + h2, kx:kx + w2, :]                # (H2, W2, C) bf16
            acc = acc + jnp.dot(a.reshape(h2 * w2, c), w_ref[3 * ky + kx],
                                preferred_element_type=jnp.float32)
    o_ref[0] = acc


# ------------------------------ JAX glue ----------------------------------- #

def _bilinear_matrix(in_size, scale_factor):
    """Interpolation matrix matching F.interpolate(mode='bilinear', align_corners=False)."""
    out_size = int(np.floor(in_size * scale_factor))
    ratio = 1.0 / float(scale_factor)
    d = np.arange(out_size, dtype=np.float64)
    src = np.maximum(ratio * (d + 0.5) - 0.5, 0.0)
    i0 = np.minimum(np.floor(src).astype(np.int64), in_size - 1)
    i1 = np.minimum(i0 + 1, in_size - 1)
    frac = src - i0
    A = np.zeros((out_size, in_size), dtype=np.float32)
    A[np.arange(out_size), i0] += (1.0 - frac)
    A[np.arange(out_size), i1] += frac
    return jnp.asarray(A)


def up_conv_layer_forward(x, gamma, beta, conv_weight, scale_factor, eps=1e-3):
    """upConvLayer.forward: BN(train) -> ReLU -> bilinear upsample -> WSConv2d(3x3, no bias)."""
    N, C, H, W = x.shape
    Cout = conv_weight.shape[0]
    # TODO(synk): BatchNorm2d running_mean/running_var (momentum) buffer updates are
    # training-side state and are not materialized here; only the forward activation is.

    # BatchNorm2d training-mode normalization: per-channel batch stats, biased variance.
    mean = jnp.mean(x, axis=(0, 2, 3))
    var = jnp.var(x, axis=(0, 2, 3))
    inv = 1.0 / jnp.sqrt(var + eps)
    scale = (gamma * inv).reshape(C, 1, 1).astype(jnp.float32)
    shift = (beta - mean * gamma * inv).reshape(C, 1, 1).astype(jnp.float32)

    Ah = _bilinear_matrix(H, scale_factor)          # (H2, H)
    Aw = _bilinear_matrix(W, scale_factor)          # (W2, W)
    H2, W2 = Ah.shape[0], Aw.shape[0]
    Awt = jnp.transpose(Aw)                         # (W, W2)

    # ---------------- kernel 1: BN + ReLU + bilinear upsample ---------------- #
    Cb = min(C, 64)
    up = pl.pallas_call(
        _bn_relu_upsample_kernel,
        out_shape=jax.ShapeDtypeStruct((N, C, H2, W2), jnp.bfloat16),
        grid=(N, pl.cdiv(C, Cb)),
        in_specs=[
            pl.BlockSpec((1, Cb, H, W), lambda n, j: (n, j, 0, 0)),
            pl.BlockSpec((Cb, 1, 1), lambda n, j: (j, 0, 0)),
            pl.BlockSpec((Cb, 1, 1), lambda n, j: (j, 0, 0)),
            pl.BlockSpec((H2, H), lambda n, j: (0, 0)),
            pl.BlockSpec((W, W2), lambda n, j: (0, 0)),
        ],
        out_specs=pl.BlockSpec((1, Cb, H2, W2), lambda n, j: (n, j, 0, 0)),
        compiler_params=pltpu.CompilerParams(
            dimension_semantics=("parallel", "parallel"),
            vmem_limit_bytes=64 * 1024 * 1024),
    )(x.astype(jnp.float32), scale, shift, Ah, Awt)

    # Single bf16 layout pass (transpose + zero-pad) feeding the conv kernel.
    xp = jnp.pad(jnp.transpose(up, (0, 2, 3, 1)), ((0, 0), (1, 1), (1, 1), (0, 0)))

    # Weight standardization (matches WSConv2d.forward), repacked tap-major in bf16.
    w = conv_weight
    w = w - jnp.mean(w, axis=(1, 2, 3), keepdims=True)
    std = jnp.std(w.reshape(Cout, -1), axis=1, ddof=1).reshape(Cout, 1, 1, 1) + 1e-5
    w = w / std
    wt = jnp.transpose(w, (2, 3, 1, 0)).reshape(9, C, Cout).astype(jnp.bfloat16)

    # ---------------- kernel 2: weight-standardized 3x3 conv ---------------- #
    TCout = min(Cout, 256)
    flops = 2 * N * H2 * W2 * 9 * C * Cout
    bytes_accessed = int(xp.size) * 2 + int(wt.size) * 2 + N * H2 * W2 * Cout * 4
    out_rows = pl.pallas_call(
        _ws_conv3x3_kernel,
        out_shape=jax.ShapeDtypeStruct((N, H2 * W2, Cout), jnp.float32),
        grid=(N, pl.cdiv(Cout, TCout)),
        in_specs=[
            pl.BlockSpec((1, H2 + 2, W2 + 2, C), lambda n, j: (n, 0, 0, 0)),
            pl.BlockSpec((9, C, TCout), lambda n, j: (0, 0, j)),
        ],
        out_specs=pl.BlockSpec((1, H2 * W2, TCout), lambda n, j: (n, 0, j)),
        compiler_params=pltpu.CompilerParams(
            dimension_semantics=("parallel", "parallel"),
            vmem_limit_bytes=64 * 1024 * 1024),
        cost_estimate=pl.CostEstimate(flops=flops, transcendentals=0,
                                      bytes_accessed=bytes_accessed),
    )(xp, wt)

    # Rows are (h2, w2)-major; reshape is free, final transpose restores NCHW.
    return jnp.transpose(out_rows.reshape(N, H2, W2, Cout), (0, 3, 1, 2))


# ------------------------------ demo / smoke test --------------------------- #

if __name__ == "__main__":
    key = jax.random.PRNGKey(0)
    k1, k2 = jax.random.split(key, 2)

    N, Cin, H, W = 2, 4, 16, 16
    Cout = 8
    scale_factor = 2

    x = jax.random.normal(k1, (N, Cin, H, W), dtype=jnp.float32)
    # nn.BatchNorm2d default affine init: weight=1, bias=0 (deterministic).
    gamma = jnp.ones((Cin,), jnp.float32)
    beta = jnp.zeros((Cin,), jnp.float32)
    # WSConv2d weight (Cout, Cin, 3, 3), bias=False; deterministic synthetic init.
    conv_weight = 0.1 * jax.random.normal(k2, (Cout, Cin, 3, 3), dtype=jnp.float32)

    out = up_conv_layer_forward(x, gamma, beta, conv_weight, scale_factor)
    out = jax.block_until_ready(out)
    assert out.shape == (N, Cout, H * scale_factor, W * scale_factor)
    assert bool(jnp.all(jnp.isfinite(out)))

    # Pure-JAX reference (f32 end-to-end); loose tolerance covers the bf16 intermediate.
    eps = 1e-3
    mean = jnp.mean(x, axis=(0, 2, 3))
    var = jnp.var(x, axis=(0, 2, 3))
    y_ref = jnp.maximum(
        (x - mean[None, :, None, None]) / jnp.sqrt(var[None, :, None, None] + eps)
        * gamma[None, :, None, None] + beta[None, :, None, None], 0.0)
    Ah = _bilinear_matrix(H, scale_factor)
    Aw = _bilinear_matrix(W, scale_factor)
    up_ref = jnp.einsum('ph,nchw,qw->ncpq', Ah, y_ref, Aw)
    w_std = conv_weight - jnp.mean(conv_weight, axis=(1, 2, 3), keepdims=True)
    std = jnp.std(w_std.reshape(Cout, -1), axis=1, ddof=1).reshape(Cout, 1, 1, 1) + 1e-5
    w_std = w_std / std
    ref = jax.lax.conv_general_dilated(up_ref, w_std, (1, 1), ((1, 1), (1, 1)),
                                       dimension_numbers=('NCHW', 'OIHW', 'NCHW'))
    assert bool(jnp.allclose(out, ref, rtol=0.1, atol=0.5))

    print("KERNEL_OK")
</pallas_src>

<mosaic_0001>
module attributes {stable_mosaic.version = 11 : i64} {
  func.func @_bn_relu_upsample_kernel(%arg0: i32, %arg1: i32, %arg2: memref<1x4x16x16xf32, #tpu.memory_space<vmem>>, %arg3: memref<4x1x1xf32, #tpu.memory_space<vmem>>, %arg4: memref<4x1x1xf32, #tpu.memory_space<vmem>>, %arg5: memref<32x16xf32, #tpu.memory_space<vmem>>, %arg6: memref<16x32xf32, #tpu.memory_space<vmem>>, %arg7: memref<1x4x32x32xbf16, #tpu.memory_space<vmem>>) attributes {dimension_semantics = [#tpu.dimension_semantics<parallel>, #tpu.dimension_semantics<parallel>], iteration_bounds = array<i64: 2, 1>, scalar_prefetch = 0 : i64, scratch_operands = 0 : i64, tpu.core_type = #tpu.core_type<tc>, window_params = [{transform_indices = @transform_0, window_bounds = array<i64: 1, 4, 16, 16>}, {transform_indices = @transform_1, window_bounds = array<i64: 4, 1, 1>}, {transform_indices = @transform_2, window_bounds = array<i64: 4, 1, 1>}, {pipeline_mode = #tpu.pipeline_mode<synchronous>, transform_indices = @transform_3, window_bounds = array<i64: 32, 16>}, {pipeline_mode = #tpu.pipeline_mode<synchronous>, transform_indices = @transform_4, window_bounds = array<i64: 16, 32>}, {transform_indices = @transform_5, window_bounds = array<i64: 1, 4, 32, 32>}]} {
    %c0 = arith.constant 0 : index
    %c0_0 = arith.constant 0 : index
    %c0_1 = arith.constant 0 : index
    %c0_2 = arith.constant 0 : index
    %0 = vector.load %arg2[%c0, %c0_0, %c0_1, %c0_2] : memref<1x4x16x16xf32, #tpu.memory_space<vmem>>, vector<1x4x16x16xf32>
    %1 = vector.shape_cast %0 : vector<1x4x16x16xf32> to vector<4x16x16xf32>
    %c0_3 = arith.constant 0 : index
    %c0_4 = arith.constant 0 : index
    %c0_5 = arith.constant 0 : index
    %2 = vector.load %arg3[%c0_3, %c0_4, %c0_5] : memref<4x1x1xf32, #tpu.memory_space<vmem>>, vector<4x1x1xf32>
    %3 = vector.broadcast %2 : vector<4x1x1xf32> to vector<4x16x16xf32>
    %4 = arith.mulf %1, %3 : vector<4x16x16xf32>
    %c0_6 = arith.constant 0 : index
    %c0_7 = arith.constant 0 : index
    %c0_8 = arith.constant 0 : index
    %5 = vector.load %arg4[%c0_6, %c0_7, %c0_8] : memref<4x1x1xf32, #tpu.memory_space<vmem>>, vector<4x1x1xf32>
    %6 = vector.broadcast %5 : vector<4x1x1xf32> to vector<4x16x16xf32>
    %7 = arith.addf %4, %6 : vector<4x16x16xf32>
    %cst = arith.constant 0.000000e+00 : f32
    %8 = vector.broadcast %cst : f32 to vector<4x16x16xf32>
    %9 = arith.maximumf %7, %8 : vector<4x16x16xf32>
    %10 = vector.shape_cast %9 : vector<4x16x16xf32> to vector<64x16xf32>
    %c0_9 = arith.constant 0 : index
    %c0_10 = arith.constant 0 : index
    %11 = vector.load %arg6[%c0_9, %c0_10] : memref<16x32xf32, #tpu.memory_space<vmem>>, vector<16x32xf32>
    %cst_11 = arith.constant dense<0.000000e+00> : vector<64x32xf32>
    %12 = tpu.matmul %10, %11, %cst_11 {dimension_numbers = #tpu.dot_dimension_numbers<[1], [0], [0], [1], [0, 0, 1, 1], [], []>} : vector<64x16xf32>, vector<16x32xf32>, vector<64x32xf32> -> vector<64x32xf32>
    %13 = vector.shape_cast %12 : vector<64x32xf32> to vector<4x16x32xf32>
    %c0_12 = arith.constant 0 : index
    %c0_13 = arith.constant 0 : index
    %14 = vector.load %arg5[%c0_12, %c0_13] : memref<32x16xf32, #tpu.memory_space<vmem>>, vector<32x16xf32>
    %15 = vector.shape_cast %14 : vector<32x16xf32> to vector<1x32x16xf32>
    %16 = vector.broadcast %15 : vector<1x32x16xf32> to vector<4x32x16xf32>
    %cst_14 = arith.constant dense<0.000000e+00> : vector<4x32x32xf32>
    %17 = tpu.matmul %16, %13, %cst_14 {dimension_numbers = #tpu.dot_dimension_numbers<[2], [1], [1], [2], [0, 0, 0, 1, 1, 2], [0], [0]>} : vector<4x32x16xf32>, vector<4x16x32xf32>, vector<4x32x32xf32> -> vector<4x32x32xf32>
    %18 = arith.truncf %17 : vector<4x32x32xf32> to vector<4x32x32xbf16>
    %c0_15 = arith.constant 0 : index
    %c0_16 = arith.constant 0 : index
    %c0_17 = arith.constant 0 : index
    %c0_18 = arith.constant 0 : index
    %19 = vector.load %arg7[%c0_15, %c0_16, %c0_17, %c0_18] : memref<1x4x32x32xbf16, #tpu.memory_space<vmem>>, vector<1x4x32x32xbf16>
    %20 = vector.shape_cast %19 : vector<1x4x32x32xbf16> to vector<4x32x32xbf16>
    %21 = vector.shape_cast %18 : vector<4x32x32xbf16> to vector<1x4x32x32xbf16>
    tpu.vector_store %arg7[%c0_15, %c0_16, %c0_17, %c0_18], %21 {strides = array<i32>} : memref<1x4x32x32xbf16, #tpu.memory_space<vmem>>, vector<1x4x32x32xbf16>,
    return
  }
  func.func @transform_0(%arg0: i32, %arg1: i32) -> (i32, i32, i32, i32) {
    %c0_i32 = arith.constant 0 : i32
    %c0_i32_0 = arith.constant 0 : i32
    %c0_i32_1 = arith.constant 0 : i32
    return %arg0, %arg1, %c0_i32, %c0_i32_0 : i32, i32, i32, i32
  }
  func.func @transform_1(%arg0: i32, %arg1: i32) -> (i32, i32, i32) {
    %c0_i32 = arith.constant 0 : i32
    %c0_i32_0 = arith.constant 0 : i32
    %c0_i32_1 = arith.constant 0 : i32
    return %arg1, %c0_i32, %c0_i32_0 : i32, i32, i32
  }
  func.func @transform_2(%arg0: i32, %arg1: i32) -> (i32, i32, i32) {
    %c0_i32 = arith.constant 0 : i32
    %c0_i32_0 = arith.constant 0 : i32
    %c0_i32_1 = arith.constant 0 : i32
    return %arg1, %c0_i32, %c0_i32_0 : i32, i32, i32
  }
  func.func @transform_3(%arg0: i32, %arg1: i32) -> (i32, i32) {
    %c0_i32 = arith.constant 0 : i32
    %c0_i32_0 = arith.constant 0 : i32
    %c0_i32_1 = arith.constant 0 : i32
    return %c0_i32, %c0_i32_0 : i32, i32
  }
  func.func @transform_4(%arg0: i32, %arg1: i32) -> (i32, i32) {
    %c0_i32 = arith.constant 0 : i32
    %c0_i32_0 = arith.constant 0 : i32
    %c0_i32_1 = arith.constant 0 : i32
    return %c0_i32, %c0_i32_0 : i32, i32
  }
  func.func @transform_5(%arg0: i32, %arg1: i32) -> (i32, i32, i32, i32) {
    %c0_i32 = arith.constant 0 : i32
    %c0_i32_0 = arith.constant 0 : i32
    %c0_i32_1 = arith.constant 0 : i32
    return %arg0, %arg1, %c0_i32, %c0_i32_0 : i32, i32, i32, i32
  }
}

</mosaic_0001>

<llo_original>
// kernel: tpu_custom_call.1
$region0: #{tpu_custom_call.1}
  #allocation0 [shape = 'u32[]', space=smem, size = 0x4, offset = 0x4, fixed_abs, tag = 'smem constant byte address 0x4 - core index']
  #allocation1 [shape = 'u32[144,128]{1,0:T(1,128)}', space=vmem, size = 0x12000, scoped, tag = 'internal scratch']
  %s0 = inlined_call_operand.hbm [shape: f32[2,4,16,16], index: 0, kind: input, shape index: {}]
  %s1 = inlined_call_operand.hbm [shape: f32[4,1,1], index: 1, kind: input, shape index: {}]
  %s2 = inlined_call_operand.hbm [shape: f32[4,1,1], index: 2, kind: input, shape index: {}]
  %s3 = inlined_call_operand.hbm [shape: f32[32,16], index: 3, kind: input, shape index: {}]
  %s4 = inlined_call_operand.hbm [shape: f32[16,32], index: 4, kind: input, shape index: {}]
  %s5 = inlined_call_operand.hbm [shape: bf16[2,4,32,32], index: 5, kind: output, shape index: {}]
  %s6 = sld [smem:[#allocation0]]
  $region73: #{tpu_custom_call.1} parent=0
    _
  %s8 = ssub.s32 1, %s6
  %s9 = scalar_select 0, %s8, %s6
  $region1: #{tpu_custom_call.1} parent=0
    #allocation2 [shape = 'u8[65536]{0}', space=vmem, size = 0x10000, scoped, tag = 'input window, operand 0']
    #allocation3 [shape = 's32[2]{0}', space=sflag, size = 0x8, scoped, tag = 'scoped memory for tpu_custom_call.1']
    #allocation4 [shape = 's32[2]{0}', space=sflag, size = 0x8, scoped, tag = 'scoped memory for tpu_custom_call.1']
    #allocation5 [shape = 'u8[2048]{0}', space=vmem, size = 0x800, scoped, tag = 'input window, operand 1, single buffered']
    #allocation6 [shape = 's32[1]{0}', space=sflag, size = 0x4, scoped, tag = 'scoped memory for tpu_custom_call.1']
    #allocation7 [shape = 'u8[2048]{0}', space=vmem, size = 0x800, scoped, tag = 'input window, operand 2, single buffered']
    #allocation8 [shape = 'u8[16384]{0}', space=vmem, size = 0x4000, scoped, tag = 'input window, operand 3, single buffered']
    #allocation9 [shape = 's32[1]{0}', space=sflag, size = 0x4, scoped, tag = 'scoped memory for tpu_custom_call.1']
    #allocation10 [shape = 'u8[8192]{0}', space=vmem, size = 0x2000, scoped, tag = 'input window, operand 4, single buffered']
    #allocation11 [shape = 'u8[65536]{0}', space=vmem, size = 0x10000, scoped, tag = 'output window, operand 0']
    %10 = vsyncpa [#allocation3], 0
    %s11 = scalar_lea.sflag [#allocation3], 1
    %12 = vsyncpa %s11, 0
    %13 = vsyncpa [#allocation6], 0
    %14 = vsyncpa [#allocation9], 0
    %15 = vsyncpa [#allocation4], 0
    %s16 = scalar_lea.sflag [#allocation4], 1
    %17 = vsyncpa %s16, 0
    loop: start=0, step=1, limit=4
    $region2: #{tpu_custom_call.1} parent=1 // loop_pre_header
      _
    $region3: #{tpu_custom_call.1} parent=1 // loop_header
      %s19 = sphi 0, %s23
      %p20 = scmp.ge.s32.totalorder %s19, 4
      %s26 = sphi 0, %s38
      %s27 = sphi 0, %s34
      %s28 = sphi 0, %s26
      %s29 = sphi 0, %s27
      %s30 = sphi 0, %s28
      %s31 = sphi 0, %s29
      %s43 = sphi 0, %s45
      %s46 = sphi 0, %s43
      %s47 = sphi 0, %s46
      %s63 = sphi 0, %s47
      %s69 = sphi 0, %s71
      %s72 = sphi 0, %s69
      %s73 = sphi 0, %s72
      %s89 = sphi 0, %s73
      %s95 = sphi 0, %s97
      %s98 = sphi 0, %s95
      %s99 = sphi 0, %s98
      %s115 = sphi 0, %s99
      %s119 = sphi 0, %s119
      %s121 = sphi 0, %s119
      %s122 = sphi 0, %s121
      %s136 = sphi 0, %s122
      %s140 = sphi 0, %s140
      %s142 = sphi 0, %s140
      %s143 = sphi 0, %s142
      %s157 = sphi 0, %s143
      %s165 = sphi 0, %s167
      %s168 = sphi 0, %s165
      %s169 = sphi 0, %s168
      %s185 = sphi 0, %s169
    $region4: #{tpu_custom_call.1} parent=1 // loop_header_branch
      %22 = sbr.rel (%p20) target = $region8
    $region5: #{tpu_custom_call.1} parent=1 // loop_body
      %s24 = ssub.s32 %s19, 1
      %s25 = ssub.s32 %s19, 2
      %s32 = sadd.s32 1, %s27
      %p33 = scmp.ge.s32.totalorder %s32, 1
      %s34 = scalar_select %p33, 0, %s32
      %s35 = sadd.s32 1, %s26
      %s36 = scalar_select %p33, %s35, %s26
      %p37 = scmp.ge.s32.totalorder %s36, 2
      %s38 = scalar_select %p37, 0, %s36
      %s39 = ssub.s32 %s26, %s38
      %s40 = ssub.s32 %s27, %s34
      %s41 = sor.u32 %s39, %s40
      %p42 = scmp.eq.s32.totalorder %s41, 0
      %s44 = sadd.s32 %s43, 1
      %s45 = scalar_select %p42, %s43, %s44
      %p48 = pneg %p42
      %p49 = scmp.eq.s32.totalorder %s19, 1
      %p50 = por %p48, %p49
      %p51 = scmp.ne.s32.totalorder %s43, %s46
      %p52 = scmp.eq.s32.totalorder %s19, 0
      %p53 = por %p51, %p52
      %p54 = scmp.ne.s32.totalorder %s43, %s46
      %p55 = scmp.eq.s32.totalorder %s24, 1
      %p56 = por %p54, %p55
      %p57 = scmp.ne.s32.totalorder %s46, %s47
      %p58 = scmp.eq.s32.totalorder %s24, 0
      %p59 = por %p57, %p58
      %p60 = scmp.ne.s32.totalorder %s46, %s47
      %p61 = scmp.eq.s32.totalorder %s25, 1
      %p62 = por %p60, %p61
      %p64 = scmp.ne.s32.totalorder %s47, %s63
      %p65 = scmp.eq.s32.totalorder %s25, 0
      %p66 = por %p64, %p65
      %s67 = ssub.s32 %s27, %s34
      %p68 = scmp.eq.s32.totalorder %s67, 0
      %s70 = sadd.s32 %s69, 1
      %s71 = scalar_select %p68, %s69, %s70
      %p74 = pneg %p68
      %p75 = scmp.eq.s32.totalorder %s19, 1
      %p76 = por %p74, %p75
      %p77 = scmp.ne.s32.totalorder %s69, %s72
      %p78 = scmp.eq.s32.totalorder %s19, 0
      %p79 = por %p77, %p78
      %p80 = scmp.ne.s32.totalorder %s69, %s72
      %p81 = scmp.eq.s32.totalorder %s24, 1
      %p82 = por %p80, %p81
      %p83 = scmp.ne.s32.totalorder %s72, %s73
      %p84 = scmp.eq.s32.totalorder %s24, 0
      %p85 = por %p83, %p84
      %p86 = scmp.ne.s32.totalorder %s72, %s73
      %p87 = scmp.eq.s32.totalorder %s25, 1
      %p88 = por %p86, %p87
      %p90 = scmp.ne.s32.totalorder %s73, %s89
      %p91 = scmp.eq.s32.totalorder %s25, 0
      %p92 = por %p90, %p91
      %s93 = ssub.s32 %s27, %s34
      %p94 = scmp.eq.s32.totalorder %s93, 0
      %s96 = sadd.s32 %s95, 1
      %s97 = scalar_select %p94, %s95, %s96
      %p100 = pneg %p94
      %p101 = scmp.eq.s32.totalorder %s19, 1
      %p102 = por %p100, %p101
      %p103 = scmp.ne.s32.totalorder %s95, %s98
      %p104 = scmp.eq.s32.totalorder %s19, 0
      %p105 = por %p103, %p104
      %p106 = scmp.ne.s32.totalorder %s95, %s98
      %p107 = scmp.eq.s32.totalorder %s24, 1
      %p108 = por %p106, %p107
      %p109 = scmp.ne.s32.totalorder %s98, %s99
      %p110 = scmp.eq.s32.totalorder %s24, 0
      %p111 = por %p109, %p110
      %p112 = scmp.ne.s32.totalorder %s98, %s99
      %p113 = scmp.eq.s32.totalorder %s25, 1
      %p114 = por %p112, %p113
      %p116 = scmp.ne.s32.totalorder %s99, %s115
      %p117 = scmp.eq.s32.totalorder %s25, 0
      %p118 = por %p116, %p117
      %s120 = sadd.s32 %s119, 1
      %p123 = scmp.eq.s32.totalorder %s19, 1
      %p124 = scmp.ne.s32.totalorder %s119, %s121
      %p125 = scmp.eq.s32.totalorder %s19, 0
      %p126 = por %p124, %p125
      %p127 = scmp.ne.s32.totalorder %s119, %s121
      %p128 = scmp.eq.s32.totalorder %s24, 1
      %p129 = por %p127, %p128
      %p130 = scmp.ne.s32.totalorder %s121, %s122
      %p131 = scmp.eq.s32.totalorder %s24, 0
      %p132 = por %p130, %p131
      %p133 = scmp.ne.s32.totalorder %s121, %s122
      %p134 = scmp.eq.s32.totalorder %s25, 1
      %p135 = por %p133, %p134
      %p137 = scmp.ne.s32.totalorder %s122, %s136
      %p138 = scmp.eq.s32.totalorder %s25, 0
      %p139 = por %p137, %p138
      %s141 = sadd.s32 %s140, 1
      %p144 = scmp.eq.s32.totalorder %s19, 1
      %p145 = scmp.ne.s32.totalorder %s140, %s142
      %p146 = scmp.eq.s32.totalorder %s19, 0
      %p147 = por %p145, %p146
      %p148 = scmp.ne.s32.totalorder %s140, %s142
      %p149 = scmp.eq.s32.totalorder %s24, 1
      %p150 = por %p148, %p149
      %p151 = scmp.ne.s32.totalorder %s142, %s143
      %p152 = scmp.eq.s32.totalorder %s24, 0
      %p153 = por %p151, %p152
      %p154 = scmp.ne.s32.totalorder %s142, %s143
      %p155 = scmp.eq.s32.totalorder %s25, 1
      %p156 = por %p154, %p155
      %p158 = scmp.ne.s32.totalorder %s143, %s157
      %p159 = scmp.eq.s32.totalorder %s25, 0
      %p160 = por %p158, %p159
      %s161 = ssub.s32 %s26, %s38
      %s162 = ssub.s32 %s27, %s34
      %s163 = sor.u32 %s161, %s162
      %p164 = scmp.eq.s32.totalorder %s163, 0
      %s166 = sadd.s32 %s165, 1
      %s167 = scalar_select %p164, %s165, %s166
      %p170 = pneg %p164
      %p171 = scmp.eq.s32.totalorder %s19, 1
      %p172 = por %p170, %p171
      %p173 = scmp.ne.s32.totalorder %s165, %s168
      %p174 = scmp.eq.s32.totalorder %s19, 0
      %p175 = por %p173, %p174
      %p176 = scmp.ne.s32.totalorder %s165, %s168
      %p177 = scmp.eq.s32.totalorder %s24, 1
      %p178 = por %p176, %p177
      %p179 = scmp.ne.s32.totalorder %s168, %s169
      %p180 = scmp.eq.s32.totalorder %s24, 0
      %p181 = por %p179, %p180
      %p182 = scmp.ne.s32.totalorder %s168, %s169
      %p183 = scmp.eq.s32.totalorder %s25, 1
      %p184 = por %p182, %p183
      %p186 = scmp.ne.s32.totalorder %s169, %s185
      %p187 = scmp.eq.s32.totalorder %s25, 0
      %p188 = por %p186, %p187
      %p189 = scmp.le.s32.totalorder 1, %s19
      %p190 = scmp.lt.s32.totalorder %s19, 3
      %p191 = pnand %p189, %p190
      %p192 = pneg %p191
      // Predicated region
      $region9: #{tpu_custom_call.1} parent=5 // pred_check
        _
      $region10: #{tpu_custom_call.1} parent=5 // pred_check_branch
        %194 = sbr.rel (%p191) target = $region12
      $region11: #{tpu_custom_call.1} parent=5 // pred_region
        %s195 = ssub.s32 %s19, 1
        // Predicated region
        $region13: #{tpu_custom_call.1} parent=11 // pred_check
          %p196 = pneg %p85
        $region14: #{tpu_custom_call.1} parent=11 // pred_check_branch
          %198 = sbr.rel (%p196) target = $region16
        $region15: #{tpu_custom_call.1} parent=11 // pred_region
          %s199 = smul.u32 4, %s29
          %s201 = ssub.s32 64, 64
          %202 = vsyncadd [#allocation6], %s201
          %s203 = smul.addr %s199, 16
          %s204 = scalar_lea.hbm %s1, %s203
          %s205 = sshll.u32 [#allocation5], 4
          %s206 = int_to_ptr.vmem [resolvable:$true] %s205
          %211 = dma.hbm_to_vmem [thread:$0]  %s204, 64, %s206, [#allocation6], 16, 16, 1
        $region16: #{tpu_custom_call.1} parent=11 // pred_fallthru
          _
        // Predicated region
        $region17: #{tpu_custom_call.1} parent=11 // pred_check
          %p212 = pneg %p111
        $region18: #{tpu_custom_call.1} parent=11 // pred_check_branch
          %214 = sbr.rel (%p212) target = $region20
        $region19: #{tpu_custom_call.1} parent=11 // pred_region
          %s215 = smul.u32 4, %s29
          %s217 = ssub.s32 64, 64
          %218 = vsyncadd [#allocation6], %s217
          %s219 = smul.addr %s215, 16
          %s220 = scalar_lea.hbm %s2, %s219
          %s221 = sshll.u32 [#allocation7], 4
          %s222 = int_to_ptr.vmem [resolvable:$true] %s221
          %227 = dma.hbm_to_vmem [thread:$0]  %s220, 64, %s222, [#allocation6], 16, 16, 1
        $region20: #{tpu_custom_call.1} parent=11 // pred_fallthru
          _
        // Predicated region
        $region21: #{tpu_custom_call.1} parent=11 // pred_check
          %p228 = pneg %p132
        $region22: #{tpu_custom_call.1} parent=11 // pred_check_branch
          %230 = sbr.rel (%p228) target = $region24
        $region23: #{tpu_custom_call.1} parent=11 // pred_region
          %s232 = ssub.s32 512, 512
          %233 = vsyncadd [#allocation9], %s232
          %s234 = sshll.u32 [#allocation8], 4
          %s235 = int_to_ptr.vmem [resolvable:$true] %s234
          %240 = dma.hbm_to_vmem [thread:$0]  %s3, 512, %s235, [#allocation9], 128, 128, 8
        $region24: #{tpu_custom_call.1} parent=11 // pred_fallthru
          _
        // Predicated region
        $region25: #{tpu_custom_call.1} parent=11 // pred_check
          %p241 = pneg %p153
        $region26: #{tpu_custom_call.1} parent=11 // pred_check_branch
          %243 = sbr.rel (%p241) target = $region28
        $region27: #{tpu_custom_call.1} parent=11 // pred_region
          %s245 = ssub.s32 256, 256
          %246 = vsyncadd [#allocation9], %s245
          %s247 = sshll.u32 [#allocation10], 4
          %s248 = int_to_ptr.vmem [resolvable:$true] %s247
          %253 = dma.hbm_to_vmem [thread:$0]  %s4, 256, %s248, [#allocation9], 128, 128, 8
        $region28: #{tpu_custom_call.1} parent=11 // pred_fallthru
          _
      $region12: #{tpu_custom_call.1} parent=5 // pred_fallthru
        _
      %p254 = scmp.lt.s32.totalorder %s19, 2
      // Predicated region
      $region29: #{tpu_custom_call.1} parent=5 // pred_check
        %p255 = pneg %p254
      $region30: #{tpu_custom_call.1} parent=5 // pred_check_branch
        %257 = sbr.rel (%p255) target = $region32
      $region31: #{tpu_custom_call.1} parent=5 // pred_region
        // Predicated region
        $region33: #{tpu_custom_call.1} parent=31 // pred_check
          %p258 = pneg %p53
        $region34: #{tpu_custom_call.1} parent=31 // pred_check_branch
          %260 = sbr.rel (%p258) target = $region36
        $region35: #{tpu_custom_call.1} parent=31 // pred_region
          %s261 = sand.u32 %s43, 1
          %s262 = scalar_lea.sflag [#allocation3], %s261
          %s263 = sand.u32 %s43, 1
          %s264 = smul.addr %s263, 64
          %s265 = scalar_lea.vmem [#allocation2], %s264
          %s266 = smul.u32 4, %s27
          %s268 = ssub.s32 1024, 1024
          %269 = vsyncadd %s262, %s268
          %s270 = smul.addr %s266, 2
          %s271 = smul.addr %s26, 8
          %s272 = sadd.s32 %s270, %s271
          %s273 = smul.addr %s272, 128
          %s274 = scalar_lea.hbm %s0, %s273
          %s275 = sshll.u32 %s265, 4
          %s276 = int_to_ptr.vmem [resolvable:$true] %s275
          %281 = dma.hbm_to_vmem [thread:$0]  %s274, 1024, %s276, %s262, 128, 128, 8
        $region36: #{tpu_custom_call.1} parent=31 // pred_fallthru
          _
      $region32: #{tpu_custom_call.1} parent=5 // pred_fallthru
        _
      %p282 = scmp.le.s32.totalorder 1, %s19
      %p283 = scmp.lt.s32.totalorder %s19, 3
      %p284 = pnand %p282, %p283
      %p285 = pneg %p284
      // Predicated region
      $region37: #{tpu_custom_call.1} parent=5 // pred_check
        _
      $region38: #{tpu_custom_call.1} parent=5 // pred_check_branch
        %287 = sbr.rel (%p284) target = $region40
      $region39: #{tpu_custom_call.1} parent=5 // pred_region
        %s288 = ssub.s32 %s19, 1
        %s289 = sand.u32 %s46, 1
        %s290 = scalar_lea.sflag [#allocation3], %s289
        %s291 = sand.u32 %s46, 1
        %s292 = smul.addr %s291, 64
        %s293 = scalar_lea.vmem [#allocation2], %s292
        // Predicated region
        $region41: #{tpu_custom_call.1} parent=39 // pred_check
          %p294 = pneg %p59
        $region42: #{tpu_custom_call.1} parent=39 // pred_check_branch
          %296 = sbr.rel (%p294) target = $region44
        $region43: #{tpu_custom_call.1} parent=39 // pred_region
          %297 = dma.done %s290, 1024
        $region44: #{tpu_custom_call.1} parent=39 // pred_fallthru
          _
        // Predicated region
        $region45: #{tpu_custom_call.1} parent=39 // pred_check
          %p298 = pneg %p85
        $region46: #{tpu_custom_call.1} parent=39 // pred_check_branch
          %300 = sbr.rel (%p298) target = $region48
        $region47: #{tpu_custom_call.1} parent=39 // pred_region
          %301 = dma.done [#allocation6], 64
        $region48: #{tpu_custom_call.1} parent=39 // pred_fallthru
          _
        // Predicated region
        $region49: #{tpu_custom_call.1} parent=39 // pred_check
          %p302 = pneg %p111
        $region50: #{tpu_custom_call.1} parent=39 // pred_check_branch
          %304 = sbr.rel (%p302) target = $region52
        $region51: #{tpu_custom_call.1} parent=39 // pred_region
          %305 = dma.done [#allocation6], 64
        $region52: #{tpu_custom_call.1} parent=39 // pred_fallthru
          _
        // Predicated region
        $region53: #{tpu_custom_call.1} parent=39 // pred_check
          %p306 = pneg %p132
        $region54: #{tpu_custom_call.1} parent=39 // pred_check_branch
          %308 = sbr.rel (%p306) target = $region56
        $region55: #{tpu_custom_call.1} parent=39 // pred_region
          %309 = dma.done [#allocation9], 512
        $region56: #{tpu_custom_call.1} parent=39 // pred_fallthru
          _
        // Predicated region
        $region57: #{tpu_custom_call.1} parent=39 // pred_check
          %p310 = pneg %p153
        $region58: #{tpu_custom_call.1} parent=39 // pred_check_branch
          %312 = sbr.rel (%p310) target = $region60
        $region59: #{tpu_custom_call.1} parent=39 // pred_region
          %313 = dma.done [#allocation9], 256
        $region60: #{tpu_custom_call.1} parent=39 // pred_fallthru
          _
        %s314 = sand.u32 %s46, 1
        %s315 = scalar_lea.sflag [#allocation3], %s314
        %s316 = sand.u32 %s46, 1
        %s317 = smul.addr %s316, 64
        %s318 = scalar_lea.vmem [#allocation2], %s317
        %p319 = pneg %p59
        %p320 = pneg %p56
        %p321 = pneg %p85
        %p322 = pneg %p82
        %p323 = pneg %p111
        %p324 = pneg %p108
        %p325 = pneg %p132
        %p326 = pneg %p129
        %p327 = pneg %p153
        %p328 = pneg %p150
        %p329 = pneg %p181
        %p330 = pneg %p178
        %s331 = sand.u32 %s168, 1
        %s332 = scalar_lea.sflag [#allocation4], %s331
        %s333 = sand.u32 %s168, 1
        %s334 = smul.addr %s333, 64
        %s335 = scalar_lea.vmem [#allocation11], %s334
        %s336 = smul.u32 4, %s29
        %s337 = smul.u32 4, %s29
        %s338 = smul.u32 4, %s29
        %s339 = smul.u32 4, %s29
        %v340 = vld [vmem:[%s293] sm:$0xff]
        %v341 = vld [vmem:[%s293 + $0x8] sm:$0xff]
        %v342 = vld [vmem:[%s293 + $0x10] sm:$0xff]
        %v343 = vld [vmem:[%s293 + $0x18] sm:$0xff]
        %v344 = vld [vmem:[%s293 + $0x20] sm:$0xff]
        %v345 = vld [vmem:[%s293 + $0x28] sm:$0xff]
        %v346 = vld [vmem:[%s293 + $0x30] sm:$0xff]
        %v347 = vld [vmem:[%s293 + $0x38] sm:$0xff]
        %v348 = vld [vmem:[#allocation5] sm:$0x1]
        %v349 = vld [vmem:[#allocation5 + $0x1] sm:$0x1]
        %v350 = vld [vmem:[#allocation5 + $0x2] sm:$0x1]
        %v351 = vld [vmem:[#allocation5 + $0x3] sm:$0x1]
        %v356 = vlaneseq
        %v357 = vshrl.u32 %v356, 7
        %v358 = vsub.s32 0, %v357
        %v359 = vrot.slane %v348, %v358
        %v360 = vlaneseq
        %v361 = vshrl.u32 %v360, 7
        %v362 = vsub.s32 0, %v361
        %v363 = vrot.slane %v349, %v362
        %v364 = vlaneseq
        %v365 = vshrl.u32 %v364, 7
        %v366 = vsub.s32 0, %v365
        %v367 = vrot.slane %v350, %v366
        %v368 = vlaneseq
        %v369 = vshrl.u32 %v368, 7
        %v370 = vsub.s32 0, %v369
        %v371 = vrot.slane %v351, %v370
        %372 = vset.pattern.permute.xlu0 0
        %373 = vperm.xlu0 %372, %v359
        %v374 = vpop.permute.xlu0 %373
        %376 = vset.pattern.permute.xlu0 0
        %377 = vperm.xlu0 %376, %v363
        %v378 = vpop.permute.xlu0 %377
        %380 = vset.pattern.permute.xlu0 0
        %381 = vperm.xlu0 %380, %v367
        %v382 = vpop.permute.xlu0 %381
        %384 = vset.pattern.permute.xlu0 0
        %385 = vperm.xlu0 %384, %v371
        %v386 = vpop.permute.xlu0 %385
        %v388 = vmul.f32 %v340, %v374
        %v389 = vmul.f32 %v341, %v374
        %v390 = vmul.f32 %v342, %v378
        %v391 = vmul.f32 %v343, %v378
        %v392 = vmul.f32 %v344, %v382
        %v393 = vmul.f32 %v345, %v382
        %v394 = vmul.f32 %v346, %v386
        %v395 = vmul.f32 %v347, %v386
        %v396 = vld [vmem:[#allocation7] sm:$0x1]
        %v397 = vld [vmem:[#allocation7 + $0x1] sm:$0x1]
        %v398 = vld [vmem:[#allocation7 + $0x2] sm:$0x1]
        %v399 = vld [vmem:[#allocation7 + $0x3] sm:$0x1]
        %v404 = vlaneseq
        %v405 = vshrl.u32 %v404, 7
        %v406 = vsub.s32 0, %v405
        %v407 = vrot.slane %v396, %v406
        %v408 = vlaneseq
        %v409 = vshrl.u32 %v408, 7
        %v410 = vsub.s32 0, %v409
        %v411 = vrot.slane %v397, %v410
        %v412 = vlaneseq
        %v413 = vshrl.u32 %v412, 7
        %v414 = vsub.s32 0, %v413
        %v415 = vrot.slane %v398, %v414
        %v416 = vlaneseq
        %v417 = vshrl.u32 %v416, 7
        %v418 = vsub.s32 0, %v417
        %v419 = vrot.slane %v399, %v418
        %420 = vset.pattern.permute.xlu0 0
        %421 = vperm.xlu0 %420, %v407
        %v422 = vpop.permute.xlu0 %421
        %424 = vset.pattern.permute.xlu0 0
        %425 = vperm.xlu0 %424, %v411
        %v426 = vpop.permute.xlu0 %425
        %428 = vset.pattern.permute.xlu0 0
        %429 = vperm.xlu0 %428, %v415
        %v430 = vpop.permute.xlu0 %429
        %432 = vset.pattern.permute.xlu0 0
        %433 = vperm.xlu0 %432, %v419
        %v434 = vpop.permute.xlu0 %433
        %v436 = vadd.f32 %v388, %v422
        %v437 = vadd.f32 %v389, %v422
        %v438 = vadd.f32 %v390, %v426
        %v439 = vadd.f32 %v391, %v426
        %v440 = vadd.f32 %v392, %v430
        %v441 = vadd.f32 %v393, %v430
        %v442 = vadd.f32 %v394, %v434
        %v443 = vadd.f32 %v395, %v434
        %v444 = vmax.f32 %v436, 0.0
        %v445 = vmax.f32 %v437, 0.0
        %v446 = vmax.f32 %v438, 0.0
        %v447 = vmax.f32 %v439, 0.0
        %v448 = vmax.f32 %v440, 0.0
        %v449 = vmax.f32 %v441, 0.0
        %v450 = vmax.f32 %v442, 0.0
        %v451 = vmax.f32 %v443, 0.0
        %v452 = vld [vmem:[#allocation10] sm:$0xff]
        %v453 = vld [vmem:[#allocation10 + $0x8] sm:$0xff]
        %vm454 = vcmask 130048
        %v456 = vsel %vm454, %v444, 0
        %v459 = vsel %vm454, %v445, 0
        %v462 = vsel %vm454, %v446, 0
        %v465 = vsel %vm454, %v447, 0
        %v468 = vsel %vm454, %v448, 0
        %v471 = vsel %vm454, %v449, 0
        %v474 = vsel %vm454, %v450, 0
        %v477 = vsel %vm454, %v451, 0
        %479 = vmatprep.subr.mxu0 0.0
        %480 = vmatpush1.msra.mxu0 %v452
        %481 = vmatprep.subr.mxu0 0.0
        %482 = vmatpush1.msra.mxu0 %v453
        %483 = vmatprep.subr.mxu0 0.0
        %484 = vmatpush1.msra.mxu0 0.0
        %485 = vmatprep.subr.mxu0 0.0
        %486 = vmatpush1.msra.mxu0 0.0
        %487 = vmatprep.subr.mxu0 0.0
        %488 = vmatpush1.msra.mxu0 0.0
        %489 = vmatprep.subr.mxu0 0.0
        %490 = vmatpush1.msra.mxu0 0.0
        %491 = vmatprep.subr.mxu0 0.0
        %492 = vmatpush1.msra.mxu0 0.0
        %493 = vmatprep.subr.mxu0 0.0
        %494 = vmatpush1.msra.mxu0 0.0
        %495 = vmatprep.subr.mxu0 0.0
        %496 = vmatpush1.msra.mxu0 0.0
        %497 = vmatprep.subr.mxu0 0.0
        %498 = vmatpush1.msra.mxu0 0.0
        %499 = vmatprep.subr.mxu0 0.0
        %500 = vmatpush1.msra.mxu0 0.0
        %501 = vmatprep.subr.mxu0 0.0
        %502 = vmatpush1.msra.mxu0 0.0
        %503 = vmatprep.subr.mxu0 0.0
        %504 = vmatpush1.msra.mxu0 0.0
        %505 = vmatprep.subr.mxu0 0.0
        %506 = vmatpush1.msra.mxu0 0.0
        %507 = vmatprep.subr.mxu0 0.0
        %508 = vmatpush1.msra.mxu0 0.0
        %509 = vmatprep.subr.mxu0 0.0
        %510 = vmatpush1.msra.mxu0 0.0
        %511 = vmatprep.subr.mxu0 0.0
        %512 = vmatpush1.msra.mxu0 0.0
        %513 = vmatprep.subr.mxu0 0.0
        %514 = vmatpush1.msra.mxu0 0.0
        %515 = vmatprep.subr.mxu0 0.0
        %516 = vmatpush1.msra.mxu0 0.0
        %517 = vmatprep.subr.mxu0 0.0
        %518 = vmatpush1.msra.mxu0 0.0
        %519 = vmatprep.subr.mxu0 0.0
        %520 = vmatpush1.msra.mxu0 0.0
        %521 = vmatprep.subr.mxu0 0.0
        %522 = vmatpush1.msra.mxu0 0.0
        %523 = vmatprep.subr.mxu0 0.0
        %524 = vmatpush1.msra.mxu0 0.0
        %525 = vmatprep.subr.mxu0 0.0
        %526 = vmatpush1.msra.mxu0 0.0
        %527 = vmatprep.subr.mxu0 0.0
        %528 = vmatpush1.msra.mxu0 0.0
        %529 = vmatprep.subr.mxu0 0.0
        %530 = vmatpush1.msra.mxu0 0.0
        %531 = vmatprep.subr.mxu0 0.0
        %532 = vmatpush1.msra.mxu0 0.0
        %533 = vmatprep.subr.mxu0 0.0
        %534 = vmatpush1.msra.mxu0 0.0
        %535 = vmatprep.subr.mxu0 0.0
        %536 = vmatpush1.msra.mxu0 0.0
        %537 = vmatprep.subr.mxu0 0.0
        %538 = vmatpush1.msra.mxu0 0.0
        %539 = vmatprep.subr.mxu0 0.0
        %540 = vmatpush1.msra.mxu0 0.0
        %541 = vmatprep.subr.mxu0 0.0
        %542 = vmatpush1.msra.mxu0 0.0
        %543 = vmatprep.mubr.f32.mxu0 0.0
        %544 = vmatmul.mubr.f32.gmra.mrb[0].mxu0 %v456
        %v545 = vpop.f32.mrb[0].mxu0
        %v546 = vadd.f32 0.0, %v545
        %v547 = vpop.f32.mrb[0].mxu0
        %548 = vmatprep.mubr.f32.mxu0 0.0
        %549 = vmatmul.mubr.f32.gmra.mrb[0].mxu0 %v459
        %v550 = vpop.f32.mrb[0].mxu0
        %v551 = vadd.f32 0.0, %v550
        %v552 = vpop.f32.mrb[0].mxu0
        %553 = vmatprep.mubr.f32.mxu0 0.0
        %554 = vmatmul.mubr.f32.gmra.mrb[0].mxu0 %v462
        %v555 = vpop.f32.mrb[0].mxu0
        %v556 = vadd.f32 0.0, %v555
        %v557 = vpop.f32.mrb[0].mxu0
        %558 = vmatprep.mubr.f32.mxu0 0.0
        %559 = vmatmul.mubr.f32.gmra.mrb[0].mxu0 %v465
        %v560 = vpop.f32.mrb[0].mxu0
        %v561 = vadd.f32 0.0, %v560
        %v562 = vpop.f32.mrb[0].mxu0
        %563 = vmatprep.mubr.f32.mxu0 0.0
        %564 = vmatmul.mubr.f32.gmra.mrb[0].mxu0 %v468
        %v565 = vpop.f32.mrb[0].mxu0
        %v566 = vadd.f32 0.0, %v565
        %v567 = vpop.f32.mrb[0].mxu0
        %568 = vmatprep.mubr.f32.mxu0 0.0
        %569 = vmatmul.mubr.f32.gmra.mrb[0].mxu0 %v471
        %v570 = vpop.f32.mrb[0].mxu0
        %v571 = vadd.f32 0.0, %v570
        %v572 = vpop.f32.mrb[0].mxu0
        %573 = vmatprep.mubr.f32.mxu0 0.0
        %574 = vmatmul.mubr.f32.gmra.mrb[0].mxu0 %v474
        %v575 = vpop.f32.mrb[0].mxu0
        %v576 = vadd.f32 0.0, %v575
        %v577 = vpop.f32.mrb[0].mxu0
        %578 = vmatprep.mubr.f32.mxu0 0.0
        %579 = vmatmul.mubr.f32.gmra.mrb[0].mxu0 %v477
        %v580 = vpop.f32.mrb[0].mxu0
        %v581 = vadd.f32 0.0, %v580
        %v582 = vpop.f32.mrb[0].mxu0
        %583 = vdwg.mxu0
        %v584 = vld [vmem:[#allocation8] sm:$0xff]
        %v585 = vld [vmem:[#allocation8 + $0x8] sm:$0xff]
        %v586 = vld [vmem:[#allocation8 + $0x10] sm:$0xff]
        %v587 = vld [vmem:[#allocation8 + $0x18] sm:$0xff]
        %v589 = vsel %vm454, %v584, 0
        %v592 = vsel %vm454, %v585, 0
        %v595 = vsel %vm454, %v586, 0
        %v598 = vsel %vm454, %v587, 0
        %600 = vmatprep.subr.mxu0 0.0
        %601 = vmatpush1.msra.mxu0 %v546
        %602 = vmatprep.subr.mxu0 0.0
        %603 = vmatpush1.msra.mxu0 %v551
        %604 = vmatprep.subr.mxu0 0.0
        %605 = vmatpush1.msra.mxu0 0.0
        %606 = vmatprep.subr.mxu0 0.0
        %607 = vmatpush1.msra.mxu0 0.0
        %608 = vmatprep.subr.mxu0 0.0
        %609 = vmatpush1.msra.mxu0 0.0
        %610 = vmatprep.subr.mxu0 0.0
        %611 = vmatpush1.msra.mxu0 0.0
        %612 = vmatprep.subr.mxu0 0.0
        %613 = vmatpush1.msra.mxu0 0.0
        %614 = vmatprep.subr.mxu0 0.0
        %615 = vmatpush1.msra.mxu0 0.0
        %616 = vmatprep.subr.mxu0 0.0
        %617 = vmatpush1.msra.mxu0 0.0
        %618 = vmatprep.subr.mxu0 0.0
        %619 = vmatpush1.msra.mxu0 0.0
        %620 = vmatprep.subr.mxu0 0.0
        %621 = vmatpush1.msra.mxu0 0.0
        %622 = vmatprep.subr.mxu0 0.0
        %623 = vmatpush1.msra.mxu0 0.0
        %624 = vmatprep.subr.mxu0 0.0
        %625 = vmatpush1.msra.mxu0 0.0
        %626 = vmatprep.subr.mxu0 0.0
        %627 = vmatpush1.msra.mxu0 0.0
        %628 = vmatprep.subr.mxu0 0.0
        %629 = vmatpush1.msra.mxu0 0.0
        %630 = vmatprep.subr.mxu0 0.0
        %631 = vmatpush1.msra.mxu0 0.0
        %632 = vmatprep.subr.mxu0 0.0
        %633 = vmatpush1.msra.mxu0 0.0
        %634 = vmatprep.subr.mxu0 0.0
        %635 = vmatpush1.msra.mxu0 0.0
        %636 = vmatprep.subr.mxu0 0.0
        %637 = vmatpush1.msra.mxu0 0.0
        %638 = vmatprep.subr.mxu0 0.0
        %639 = vmatpush1.msra.mxu0 0.0
        %640 = vmatprep.subr.mxu0 0.0
        %641 = vmatpush1.msra.mxu0 0.0
        %642 = vmatprep.subr.mxu0 0.0
        %643 = vmatpush1.msra.mxu0 0.0
        %644 = vmatprep.subr.mxu0 0.0
        %645 = vmatpush1.msra.mxu0 0.0
        %646 = vmatprep.subr.mxu0 0.0
        %647 = vmatpush1.msra.mxu0 0.0
        %648 = vmatprep.subr.mxu0 0.0
        %649 = vmatpush1.msra.mxu0 0.0
        %650 = vmatprep.subr.mxu0 0.0
        %651 = vmatpush1.msra.mxu0 0.0
        %652 = vmatprep.subr.mxu0 0.0
        %653 = vmatpush1.msra.mxu0 0.0
        %654 = vmatprep.subr.mxu0 0.0
        %655 = vmatpush1.msra.mxu0 0.0
        %656 = vmatprep.subr.mxu0 0.0
        %657 = vmatpush1.msra.mxu0 0.0
        %658 = vmatprep.subr.mxu0 0.0
        %659 = vmatpush1.msra.mxu0 0.0
        %660 = vmatprep.subr.mxu0 0.0
        %661 = vmatpush1.msra.mxu0 0.0
        %662 = vmatprep.subr.mxu0 0.0
        %663 = vmatpush1.msra.mxu0 0.0
        %664 = vmatprep.mubr.f32.mxu0 0.0
        %665 = vmatmul.mubr.f32.gmra.mrb[0].mxu0 %v589
        %v666 = vpop.f32.mrb[0].mxu0
        %v667 = vadd.f32 0.0, %v666
        %v668 = vpop.f32.mrb[0].mxu0
        %669 = vmatprep.mubr.f32.mxu0 0.0
        %670 = vmatmul.mubr.f32.gmra.mrb[0].mxu0 %v592
        %v671 = vpop.f32.mrb[0].mxu0
        %v672 = vadd.f32 0.0, %v671
        %v673 = vpop.f32.mrb[0].mxu0
        %674 = vmatprep.mubr.f32.mxu0 0.0
        %675 = vmatmul.mubr.f32.gmra.mrb[0].mxu0 %v595
        %v676 = vpop.f32.mrb[0].mxu0
        %v677 = vadd.f32 0.0, %v676
        %v678 = vpop.f32.mrb[0].mxu0
        %679 = vmatprep.mubr.f32.mxu0 0.0
        %680 = vmatmul.mubr.f32.gmra.mrb[0].mxu0 %v598
        %v681 = vpop.f32.mrb[0].mxu0
        %v682 = vadd.f32 0.0, %v681
        %v683 = vpop.f32.mrb[0].mxu0
        %684 = vdwg.mxu0
        %685 = vmatprep.subr.mxu0 0.0
        %686 = vmatpush1.msra.mxu0 %v556
        %687 = vmatprep.subr.mxu0 0.0
        %688 = vmatpush1.msra.mxu0 %v561
        %689 = vmatprep.subr.mxu0 0.0
        %690 = vmatpush1.msra.mxu0 0.0
        %691 = vmatprep.subr.mxu0 0.0
        %692 = vmatpush1.msra.mxu0 0.0
        %693 = vmatprep.subr.mxu0 0.0
        %694 = vmatpush1.msra.mxu0 0.0
        %695 = vmatprep.subr.mxu0 0.0
        %696 = vmatpush1.msra.mxu0 0.0
        %697 = vmatprep.subr.mxu0 0.0
        %698 = vmatpush1.msra.mxu0 0.0
        %699 = vmatprep.subr.mxu0 0.0
        %700 = vmatpush1.msra.mxu0 0.0
        %701 = vmatprep.subr.mxu0 0.0
        %702 = vmatpush1.msra.mxu0 0.0
        %703 = vmatprep.subr.mxu0 0.0
        %704 = vmatpush1.msra.mxu0 0.0
        %705 = vmatprep.subr.mxu0 0.0
        %706 = vmatpush1.msra.mxu0 0.0
        %707 = vmatprep.subr.mxu0 0.0
        %708 = vmatpush1.msra.mxu0 0.0
        %709 = vmatprep.subr.mxu0 0.0
        %710 = vmatpush1.msra.mxu0 0.0
        %711 = vmatprep.subr.mxu0 0.0
        %712 = vmatpush1.msra.mxu0 0.0
        %713 = vmatprep.subr.mxu0 0.0
        %714 = vmatpush1.msra.mxu0 0.0
        %715 = vmatprep.subr.mxu0 0.0
        %716 = vmatpush1.msra.mxu0 0.0
        %717 = vmatprep.subr.mxu0 0.0
        %718 = vmatpush1.msra.mxu0 0.0
        %719 = vmatprep.subr.mxu0 0.0
        %720 = vmatpush1.msra.mxu0 0.0
        %721 = vmatprep.subr.mxu0 0.0
        %722 = vmatpush1.msra.mxu0 0.0
        %723 = vmatprep.subr.mxu0 0.0
        %724 = vmatpush1.msra.mxu0 0.0
        %725 = vmatprep.subr.mxu0 0.0
        %726 = vmatpush1.msra.mxu0 0.0
        %727 = vmatprep.subr.mxu0 0.0
        %728 = vmatpush1.msra.mxu0 0.0
        %729 = vmatprep.subr.mxu0 0.0
        %730 = vmatpush1.msra.mxu0 0.0
        %731 = vmatprep.subr.mxu0 0.0
        %732 = vmatpush1.msra.mxu0 0.0
        %733 = vmatprep.subr.mxu0 0.0
        %734 = vmatpush1.msra.mxu0 0.0
        %735 = vmatprep.subr.mxu0 0.0
        %736 = vmatpush1.msra.mxu0 0.0
        %737 = vmatprep.subr.mxu0 0.0
        %738 = vmatpush1.msra.mxu0 0.0
        %739 = vmatprep.subr.mxu0 0.0
        %740 = vmatpush1.msra.mxu0 0.0
        %741 = vmatprep.subr.mxu0 0.0
        %742 = vmatpush1.msra.mxu0 0.0
        %743 = vmatprep.subr.mxu0 0.0
        %744 = vmatpush1.msra.mxu0 0.0
        %745 = vmatprep.subr.mxu0 0.0
        %746 = vmatpush1.msra.mxu0 0.0
        %747 = vmatprep.subr.mxu0 0.0
        %748 = vmatpush1.msra.mxu0 0.0
        %749 = vmatprep.mubr.f32.mxu0 0.0
        %750 = vmatmul.mubr.f32.gmra.mrb[0].mxu0 %v589
        %v751 = vpop.f32.mrb[0].mxu0
        %v752 = vadd.f32 0.0, %v751
        %v753 = vpop.f32.mrb[0].mxu0
        %754 = vmatprep.mubr.f32.mxu0 0.0
        %755 = vmatmul.mubr.f32.gmra.mrb[0].mxu0 %v592
        %v756 = vpop.f32.mrb[0].mxu0
        %v757 = vadd.f32 0.0, %v756
        %v758 = vpop.f32.mrb[0].mxu0
        %759 = vmatprep.mubr.f32.mxu0 0.0
        %760 = vmatmul.mubr.f32.gmra.mrb[0].mxu0 %v595
        %v761 = vpop.f32.mrb[0].mxu0
        %v762 = vadd.f32 0.0, %v761
        %v763 = vpop.f32.mrb[0].mxu0
        %764 = vmatprep.mubr.f32.mxu0 0.0
        %765 = vmatmul.mubr.f32.gmra.mrb[0].mxu0 %v598
        %v766 = vpop.f32.mrb[0].mxu0
        %v767 = vadd.f32 0.0, %v766
        %v768 = vpop.f32.mrb[0].mxu0
        %769 = vdwg.mxu0
        %770 = vmatprep.subr.mxu0 0.0
        %771 = vmatpush1.msra.mxu0 %v566
        %772 = vmatprep.subr.mxu0 0.0
        %773 = vmatpush1.msra.mxu0 %v571
        %774 = vmatprep.subr.mxu0 0.0
        %775 = vmatpush1.msra.mxu0 0.0
        %776 = vmatprep.subr.mxu0 0.0
        %777 = vmatpush1.msra.mxu0 0.0
        %778 = vmatprep.subr.mxu0 0.0
        %779 = vmatpush1.msra.mxu0 0.0
        %780 = vmatprep.subr.mxu0 0.0
        %781 = vmatpush1.msra.mxu0 0.0
        %782 = vmatprep.subr.mxu0 0.0
        %783 = vmatpush1.msra.mxu0 0.0
        %784 = vmatprep.subr.mxu0 0.0
        %785 = vmatpush1.msra.mxu0 0.0
        %786 = vmatprep.subr.mxu0 0.0
        %787 = vmatpush1.msra.mxu0 0.0
        %788 = vmatprep.subr.mxu0 0.0
        %789 = vmatpush1.msra.mxu0 0.0
        %790 = vmatprep.subr.mxu0 0.0
        %791 = vmatpush1.msra.mxu0 0.0
        %792 = vmatprep.subr.mxu0 0.0
        %793 = vmatpush1.msra.mxu0 0.0
        %794 = vmatprep.subr.mxu0 0.0
        %795 = vmatpush1.msra.mxu0 0.0
        %796 = vmatprep.subr.mxu0 0.0
        %797 = vmatpush1.msra.mxu0 0.0
        %798 = vmatprep.subr.mxu0 0.0
        %799 = vmatpush1.msra.mxu0 0.0
        %800 = vmatprep.subr.mxu0 0.0
        %801 = vmatpush1.msra.mxu0 0.0
        %802 = vmatprep.subr.mxu0 0.0
        %803 = vmatpush1.msra.mxu0 0.0
        %804 = vmatprep.subr.mxu0 0.0
        %805 = vmatpush1.msra.mxu0 0.0
        %806 = vmatprep.subr.mxu0 0.0
        %807 = vmatpush1.msra.mxu0 0.0
        %808 = vmatprep.subr.mxu0 0.0
        %809 = vmatpush1.msra.mxu0 0.0
        %810 = vmatprep.subr.mxu0 0.0
        %811 = vmatpush1.msra.mxu0 0.0
        %812 = vmatprep.subr.mxu0 0.0
        %813 = vmatpush1.msra.mxu0 0.0
        %814 = vmatprep.subr.mxu0 0.0
        %815 = vmatpush1.msra.mxu0 0.0
        %816 = vmatprep.subr.mxu0 0.0
        %817 = vmatpush1.msra.mxu0 0.0
        %818 = vmatprep.subr.mxu0 0.0
        %819 = vmatpush1.msra.mxu0 0.0
        %820 = vmatprep.subr.mxu0 0.0
        %821 = vmatpush1.msra.mxu0 0.0
        %822 = vmatprep.subr.mxu0 0.0
        %823 = vmatpush1.msra.mxu0 0.0
        %824 = vmatprep.subr.mxu0 0.0
        %825 = vmatpush1.msra.mxu0 0.0
        %826 = vmatprep.subr.mxu0 0.0
        %827 = vmatpush1.msra.mxu0 0.0
        %828 = vmatprep.subr.mxu0 0.0
        %829 = vmatpush1.msra.mxu0 0.0
        %830 = vmatprep.subr.mxu0 0.0
        %831 = vmatpush1.msra.mxu0 0.0
        %832 = vmatprep.subr.mxu0 0.0
        %833 = vmatpush1.msra.mxu0 0.0
        %834 = vmatprep.mubr.f32.mxu0 0.0
        %835 = vmatmul.mubr.f32.gmra.mrb[0].mxu0 %v589
        %v836 = vpop.f32.mrb[0].mxu0
        %v837 = vadd.f32 0.0, %v836
        %v838 = vpop.f32.mrb[0].mxu0
        %839 = vmatprep.mubr.f32.mxu0 0.0
        %840 = vmatmul.mubr.f32.gmra.mrb[0].mxu0 %v592
        %v841 = vpop.f32.mrb[0].mxu0
        %v842 = vadd.f32 0.0, %v841
        %v843 = vpop.f32.mrb[0].mxu0
        %844 = vmatprep.mubr.f32.mxu0 0.0
        %845 = vmatmul.mubr.f32.gmra.mrb[0].mxu0 %v595
        %v846 = vpop.f32.mrb[0].mxu0
        %v847 = vadd.f32 0.0, %v846
        %v848 = vpop.f32.mrb[0].mxu0
        %849 = vmatprep.mubr.f32.mxu0 0.0
        %850 = vmatmul.mubr.f32.gmra.mrb[0].mxu0 %v598
        %v851 = vpop.f32.mrb[0].mxu0
        %v852 = vadd.f32 0.0, %v851
        %v853 = vpop.f32.mrb[0].mxu0
        %854 = vdwg.mxu0
        %855 = vmatprep.subr.mxu0 0.0
        %856 = vmatpush1.msra.mxu0 %v576
        %857 = vmatprep.subr.mxu0 0.0
        %858 = vmatpush1.msra.mxu0 %v581
        %859 = vmatprep.subr.mxu0 0.0
        %860 = vmatpush1.msra.mxu0 0.0
        %861 = vmatprep.subr.mxu0 0.0
        %862 = vmatpush1.msra.mxu0 0.0
        %863 = vmatprep.subr.mxu0 0.0
        %864 = vmatpush1.msra.mxu0 0.0
        %865 = vmatprep.subr.mxu0 0.0
        %866 = vmatpush1.msra.mxu0 0.0
        %867 = vmatprep.subr.mxu0 0.0
        %868 = vmatpush1.msra.mxu0 0.0
        %869 = vmatprep.subr.mxu0 0.0
        %870 = vmatpush1.msra.mxu0 0.0
        %871 = vmatprep.subr.mxu0 0.0
        %872 = vmatpush1.msra.mxu0 0.0
        %873 = vmatprep.subr.mxu0 0.0
        %874 = vmatpush1.msra.mxu0 0.0
        %875 = vmatprep.subr.mxu0 0.0
        %876 = vmatpush1.msra.mxu0 0.0
        %877 = vmatprep.subr.mxu0 0.0
        %878 = vmatpush1.msra.mxu0 0.0
        %879 = vmatprep.subr.mxu0 0.0
        %880 = vmatpush1.msra.mxu0 0.0
        %881 = vmatprep.subr.mxu0 0.0
        %882 = vmatpush1.msra.mxu0 0.0
        %883 = vmatprep.subr.mxu0 0.0
        %884 = vmatpush1.msra.mxu0 0.0
        %885 = vmatprep.subr.mxu0 0.0
        %886 = vmatpush1.msra.mxu0 0.0
        %887 = vmatprep.subr.mxu0 0.0
        %888 = vmatpush1.msra.mxu0 0.0
        %889 = vmatprep.subr.mxu0 0.0
        %890 = vmatpush1.msra.mxu0 0.0
        %891 = vmatprep.subr.mxu0 0.0
        %892 = vmatpush1.msra.mxu0 0.0
        %893 = vmatprep.subr.mxu0 0.0
        %894 = vmatpush1.msra.mxu0 0.0
        %895 = vmatprep.subr.mxu0 0.0
        %896 = vmatpush1.msra.mxu0 0.0
        %897 = vmatprep.subr.mxu0 0.0
        %898 = vmatpush1.msra.mxu0 0.0
        %899 = vmatprep.subr.mxu0 0.0
        %900 = vmatpush1.msra.mxu0 0.0
        %901 = vmatprep.subr.mxu0 0.0
        %902 = vmatpush1.msra.mxu0 0.0
        %903 = vmatprep.subr.mxu0 0.0
        %904 = vmatpush1.msra.mxu0 0.0
        %905 = vmatprep.subr.mxu0 0.0
        %906 = vmatpush1.msra.mxu0 0.0
        %907 = vmatprep.subr.mxu0 0.0
        %908 = vmatpush1.msra.mxu0 0.0
        %909 = vmatprep.subr.mxu0 0.0
        %910 = vmatpush1.msra.mxu0 0.0
        %911 = vmatprep.subr.mxu0 0.0
        %912 = vmatpush1.msra.mxu0 0.0
        %913 = vmatprep.subr.mxu0 0.0
        %914 = vmatpush1.msra.mxu0 0.0
        %915 = vmatprep.subr.mxu0 0.0
        %916 = vmatpush1.msra.mxu0 0.0
        %917 = vmatprep.subr.mxu0 0.0
        %918 = vmatpush1.msra.mxu0 0.0
        %919 = vmatprep.mubr.f32.mxu0 0.0
        %920 = vmatmul.mubr.f32.gmra.mrb[0].mxu0 %v589
        %v921 = vpop.f32.mrb[0].mxu0
        %v922 = vadd.f32 0.0, %v921
        %v923 = vpop.f32.mrb[0].mxu0
        %924 = vmatprep.mubr.f32.mxu0 0.0
        %925 = vmatmul.mubr.f32.gmra.mrb[0].mxu0 %v592
        %v926 = vpop.f32.mrb[0].mxu0
        %v927 = vadd.f32 0.0, %v926
        %v928 = vpop.f32.mrb[0].mxu0
        %929 = vmatprep.mubr.f32.mxu0 0.0
        %930 = vmatmul.mubr.f32.gmra.mrb[0].mxu0 %v595
        %v931 = vpop.f32.mrb[0].mxu0
        %v932 = vadd.f32 0.0, %v931
        %v933 = vpop.f32.mrb[0].mxu0
        %934 = vmatprep.mubr.f32.mxu0 0.0
        %935 = vmatmul.mubr.f32.gmra.mrb[0].mxu0 %v598
        %v936 = vpop.f32.mrb[0].mxu0
        %v937 = vadd.f32 0.0, %v936
        %v938 = vpop.f32.mrb[0].mxu0
        %939 = vdwg.mxu0
        %v940 = vpack.c.bf16 %v672, %v667
        %v941 = vpack.c.bf16 %v682, %v677
        %v942 = vpack.c.bf16 %v757, %v752
        %v943 = vpack.c.bf16 %v767, %v762
        %v944 = vpack.c.bf16 %v842, %v837
        %v945 = vpack.c.bf16 %v852, %v847
        %v946 = vpack.c.bf16 %v927, %v922
        %v947 = vpack.c.bf16 %v937, %v932
        %v956 = vunpack.c.l.b16 %v940
        %v957 = vunpack.c.h.b16 %v940
        %v958 = vunpack.c.l.b16 %v941
        %v959 = vunpack.c.h.b16 %v941
        %v960 = vunpack.c.l.b16 %v942
        %v961 = vunpack.c.h.b16 %v942
        %v962 = vunpack.c.l.b16 %v943
        %v963 = vunpack.c.h.b16 %v943
        %v964 = vunpack.c.l.b16 %v944
        %v965 = vunpack.c.h.b16 %v944
        %v966 = vunpack.c.l.b16 %v945
        %v967 = vunpack.c.h.b16 %v945
        %v968 = vunpack.c.l.b16 %v946
        %v969 = vunpack.c.h.b16 %v946
        %v970 = vunpack.c.l.b16 %v947
        %v971 = vunpack.c.h.b16 %v947
        %v972 = vpack.c.b16 %v956, %v956
        %v973 = vpack.c.b16 %v957, %v957
        %v974 = vpack.c.b16 %v958, %v958
        %v975 = vpack.c.b16 %v959, %v959
        %v976 = vpack.c.b16 %v960, %v960
        %v977 = vpack.c.b16 %v961, %v961
        %v978 = vpack.c.b16 %v962, %v962
        %v979 = vpack.c.b16 %v963, %v963
        %v980 = vpack.c.b16 %v964, %v964
        %v981 = vpack.c.b16 %v965, %v965
        %v982 = vpack.c.b16 %v966, %v966
        %v983 = vpack.c.b16 %v967, %v967
        %v984 = vpack.c.b16 %v968, %v968
        %v985 = vpack.c.b16 %v969, %v969
        %v986 = vpack.c.b16 %v970, %v970
        %v987 = vpack.c.b16 %v971, %v971
        %vm1004 = vcmask 257024
        %1005 = vst.msk [vmem:[%s335] sm:$0xf] %vm1004, %v972
        %1006 = vst.msk [vmem:[%s335 + $0x4] sm:$0xf] %vm1004, %v973
        %1007 = vst.msk [vmem:[%s335 + $0x8] sm:$0xf] %vm1004, %v974
        %1008 = vst.msk [vmem:[%s335 + $0xc] sm:$0xf] %vm1004, %v975
        %1009 = vst.msk [vmem:[%s335 + $0x10] sm:$0xf] %vm1004, %v976
        %1010 = vst.msk [vmem:[%s335 + $0x14] sm:$0xf] %vm1004, %v977
        %1011 = vst.msk [vmem:[%s335 + $0x18] sm:$0xf] %vm1004, %v978
        %1012 = vst.msk [vmem:[%s335 + $0x1c] sm:$0xf] %vm1004, %v979
        %1013 = vst.msk [vmem:[%s335 + $0x20] sm:$0xf] %vm1004, %v980
        %1014 = vst.msk [vmem:[%s335 + $0x24] sm:$0xf] %vm1004, %v981
        %1015 = vst.msk [vmem:[%s335 + $0x28] sm:$0xf] %vm1004, %v982
        %1016 = vst.msk [vmem:[%s335 + $0x2c] sm:$0xf] %vm1004, %v983
        %1017 = vst.msk [vmem:[%s335 + $0x30] sm:$0xf] %vm1004, %v984
        %1018 = vst.msk [vmem:[%s335 + $0x34] sm:$0xf] %vm1004, %v985
        %1019 = vst.msk [vmem:[%s335 + $0x38] sm:$0xf] %vm1004, %v986
        %1020 = vst.msk [vmem:[%s335 + $0x3c] sm:$0xf] %vm1004, %v987
        %s1021 = sand.u32 %s168, 1
        %s1022 = scalar_lea.sflag [#allocation4], %s1021
        %s1023 = sand.u32 %s168, 1
        %s1024 = smul.addr %s1023, 64
        %s1025 = scalar_lea.vmem [#allocation11], %s1024
        // Predicated region
        $region61: #{tpu_custom_call.1} parent=39 // pred_check
          %p1026 = pneg %p178
        $region62: #{tpu_custom_call.1} parent=39 // pred_check_branch
          %1028 = sbr.rel (%p1026) target = $region64
        $region63: #{tpu_custom_call.1} parent=39 // pred_region
          %s1029 = smul.u32 4, %s29
          %s1031 = ssub.s32 1024, 1024
          %1032 = vsyncadd %s1022, %s1031
          %s1033 = smul.addr %s1029, 4
          %s1034 = smul.addr %s28, 16
          %s1035 = sadd.s32 %s1033, %s1034
          %s1036 = smul.addr %s1035, 64
          %s1037 = scalar_lea.hbm %s5, %s1036
          %s1038 = sshll.u32 %s1025, 4
          %s1039 = int_to_ptr.vmem [resolvable:$true] %s1038
          %1044 = dma.vmem_to_hbm [thread:$0]  %s1039, 1024, %s1037, %s1022, 64, 64, 4
        $region64: #{tpu_custom_call.1} parent=39 // pred_fallthru
          _
      $region40: #{tpu_custom_call.1} parent=5 // pred_fallthru
        _
      %p1045 = scmp.le.s32.totalorder 2, %s19
      // Predicated region
      $region65: #{tpu_custom_call.1} parent=5 // pred_check
        %p1046 = pneg %p1045
      $region66: #{tpu_custom_call.1} parent=5 // pred_check_branch
        %1048 = sbr.rel (%p1046) target = $region68
      $region67: #{tpu_custom_call.1} parent=5 // pred_region
        %s1049 = ssub.s32 %s19, 2
        // Predicated region
        $region69: #{tpu_custom_call.1} parent=67 // pred_check
          %p1050 = pneg %p184
        $region70: #{tpu_custom_call.1} parent=67 // pred_check_branch
          %1052 = sbr.rel (%p1050) target = $region72
        $region71: #{tpu_custom_call.1} parent=67 // pred_region
          %s1053 = sand.u32 %s169, 1
          %s1054 = scalar_lea.sflag [#allocation4], %s1053
          %s1055 = sand.u32 %s169, 1
          %s1056 = smul.addr %s1055, 64
          %s1057 = scalar_lea.vmem [#allocation11], %s1056
          %1058 = dma.done %s1054, 1024
        $region72: #{tpu_custom_call.1} parent=67 // pred_fallthru
          _
      $region68: #{tpu_custom_call.1} parent=5 // pred_fallthru
        _
    $region6: #{tpu_custom_call.1} parent=1 // loop_footer
      %s23 = sadd.s32 1, %s19
    $region7: #{tpu_custom_call.1} parent=1 // loop_footer_branch
      %18 = sbr.rel target = $region3
    $region8: #{tpu_custom_call.1} parent=1 // loop_exit
      _
    %1059 = vsyncpa [#allocation3], 1
    %s1060 = scalar_lea.sflag [#allocation3], 1
    %1061 = vsyncpa %s1060, 1
    %1062 = vsyncpa [#allocation6], 1
    %1063 = vsyncpa [#allocation9], 1
    %1064 = vsyncpa [#allocation4], 1
    %s1065 = scalar_lea.sflag [#allocation4], 1
    %1066 = vsyncpa %s1065, 1

</llo_original>
